<compile_context>
chip_gen: v6e
topology: v6e:2x2x1
jax: 0.10.0
libtpu: 0.0.40
codegen_flags: <defaults>
</compile_context>

<pallas_src>
import functools
import math

import jax
import jax.numpy as jnp
from jax.experimental import pallas as pl
from jax.experimental.pallas import tpu as pltpu


# ----------------------------------------------------------------------------
# tiling helpers
# ----------------------------------------------------------------------------
def _round_up(x, m):
    return ((x + m - 1) // m) * m


def _pick_tk(Kp):
    """Kp is a multiple of 128; pick the largest reduction tile dividing it."""
    for tk in (512, 256, 128):
        if Kp % tk == 0:
            return tk
    return 128  # unreachable


def _pick_tn(N):
    """Lane tile: multiple of 128 when possible, otherwise the full dim."""
    if N % 256 == 0:
        return 256
    if N % 128 == 0:
        return 128
    return N            # full-dim minor block (allowed); avoids pad + slice


def _pick_tm(Mp, cap=512):
    """Largest row tile <= cap that divides Mp (Mp is a multiple of 8)."""
    for tm in (512, 256, 128, 64, 32, 16, 8):
        if tm <= cap and Mp % tm == 0:
            return tm
    return 8


_VMEM_LIMIT = 32 * 1024 * 1024


# ----------------------------------------------------------------------------
# Pallas kernels
# ----------------------------------------------------------------------------
def _matmul_kernel(a_ref, b_ref, o_ref):
    # Output block is resident across the (innermost, "arbitrary") K axis, so
    # accumulate directly into it -- no scratch buffer needed.
    @pl.when(pl.program_id(2) == 0)
    def _init():
        o_ref[...] = jnp.zeros_like(o_ref)

    o_ref[...] += jnp.dot(a_ref[...], b_ref[...],
                          preferred_element_type=jnp.float32)


def _affine_kernel(x_ref, s_ref, b_ref, o_ref, *, relu):
    y = x_ref[...] * s_ref[...] + b_ref[...]
    if relu:
        y = jnp.maximum(y, 0.0)
    o_ref[...] = y.astype(o_ref.dtype)


def _affine_res_kernel(x_ref, s_ref, b_ref, r_ref, o_ref):
    # BN affine + residual add + ReLU fused (f32 math, bf16 store).
    y = x_ref[...] * s_ref[...] + b_ref[...] + r_ref[...].astype(jnp.float32)
    o_ref[...] = jnp.maximum(y, 0.0).astype(o_ref.dtype)


# ----------------------------------------------------------------------------
# Pallas wrappers
# ----------------------------------------------------------------------------
def pallas_matmul(a, b):
    """a: (M, K) bf16, b: (Kp, N) bf16 with Kp = round_up(K, 128) (weights are
    pre-padded at construction time).  Returns (M, N) f32."""
    M, K = a.shape
    Kp, N = b.shape
    Mp = _round_up(M, 8)
    if Mp != M or Kp != K:
        a = jnp.pad(a, ((0, Mp - M), (0, Kp - K)))
    TM = _pick_tm(Mp)
    TN = _pick_tn(N)
    TK = _pick_tk(Kp)

    out = pl.pallas_call(
        _matmul_kernel,
        out_shape=jax.ShapeDtypeStruct((Mp, N), jnp.float32),
        grid_spec=pltpu.PrefetchScalarGridSpec(
            num_scalar_prefetch=0,
            grid=(Mp // TM, N // TN, Kp // TK),
            in_specs=[pl.BlockSpec((TM, TK), lambda i, j, k: (i, k)),
                      pl.BlockSpec((TK, TN), lambda i, j, k: (k, j))],
            out_specs=pl.BlockSpec((TM, TN), lambda i, j, k: (i, j))),
        compiler_params=pltpu.CompilerParams(
            dimension_semantics=("parallel", "parallel", "arbitrary"),
            vmem_limit_bytes=_VMEM_LIMIT),
    )(a, b)
    return out if Mp == M else out[:M]


def pallas_affine(x, scale, shift, relu=False, residual=None,
                  out_dtype=jnp.bfloat16):
    """y = act(x*scale + shift [+ residual]); per-column scale/shift.
    x: (M, C) f32, residual (optional): (M, C).  Tiled over M ("parallel")."""
    M, C = x.shape
    Mp = _round_up(M, 8)
    if Mp != M:
        x = jnp.pad(x, ((0, Mp - M), (0, 0)))
        if residual is not None:
            residual = jnp.pad(residual, ((0, Mp - M), (0, 0)))
    TM = _pick_tm(Mp, cap=max(8, (1 << 17) // C))
    s2 = scale.reshape(1, C).astype(jnp.float32)
    b2 = shift.reshape(1, C).astype(jnp.float32)

    row_spec = pl.BlockSpec((TM, C), lambda i: (i, 0))
    vec_spec = pl.BlockSpec((1, C), lambda i: (0, 0))
    cparams = pltpu.CompilerParams(dimension_semantics=("parallel",),
                                   vmem_limit_bytes=_VMEM_LIMIT)

    if residual is None:
        out = pl.pallas_call(
            functools.partial(_affine_kernel, relu=relu),
            out_shape=jax.ShapeDtypeStruct((Mp, C), out_dtype),
            grid=(Mp // TM,),
            in_specs=[row_spec, vec_spec, vec_spec],
            out_specs=row_spec,
            compiler_params=cparams,
        )(x, s2, b2)
    else:
        out = pl.pallas_call(
            _affine_res_kernel,
            out_shape=jax.ShapeDtypeStruct((Mp, C), out_dtype),
            grid=(Mp // TM,),
            in_specs=[row_spec, vec_spec, vec_spec, row_spec],
            out_specs=row_spec,
            compiler_params=cparams,
        )(x, s2, b2, residual)
    return out if Mp == M else out[:M]


# ----------------------------------------------------------------------------
# Conv / pooling / resize glue
# ----------------------------------------------------------------------------
def im2col(x, kh, kw, stride, padding, dilation):
    """x: (N, H, W, C) bf16 -> (N*OH*OW, kh*kw*C), K ordered (kh, kw, C)."""
    # TODO(synk): for stride-1 3x3 convs this still replicates the activation
    # kh*kw times in HBM; a direct shifted-window read inside the matmul kernel
    # would remove that remaining blowup.
    N, H, W, C = x.shape
    xp = jnp.pad(x, ((0, 0), (padding, padding), (padding, padding), (0, 0)))
    Hp, Wp = H + 2 * padding, W + 2 * padding
    OH = (Hp - dilation * (kh - 1) - 1) // stride + 1
    OW = (Wp - dilation * (kw - 1) - 1) // stride + 1
    cols = []
    for i in range(kh):
        for j in range(kw):
            h0, w0 = i * dilation, j * dilation
            patch = xp[:, h0:h0 + (OH - 1) * stride + 1:stride,
                          w0:w0 + (OW - 1) * stride + 1:stride, :]
            cols.append(patch)
    a = cols[0] if len(cols) == 1 else jnp.concatenate(cols, axis=-1)
    return a.reshape(N * OH * OW, kh * kw * C), (N, OH, OW)


def conv_block(x, cp, bias=None, stride=1, dilation=1, padding=0,
               bn=None, relu=False, residual=None, eps=1e-5):
    """Conv (Pallas bf16 MXU matmul) [+ BN(train stats) [+residual] + ReLU]
    or [+ bias].  x: NHWC; returns NHWC (bf16 when BN epilogue, else f32)."""
    x = x.astype(jnp.bfloat16)
    kh, kw, cout = cp['kh'], cp['kw'], cp['cout']
    if kh == 1 and kw == 1 and stride == 1 and padding == 0:
        n, h, w_, c = x.shape
        a, oh, ow = x.reshape(n * h * w_, c), h, w_
    else:
        a, (n, oh, ow) = im2col(x, kh, kw, stride, padding, dilation)
    y = pallas_matmul(a, cp['w2'])                       # (M, cout) f32
    if bn is not None:
        # Train-mode BN: a conv bias shifts the batch mean by the same amount,
        # so it cancels exactly in (y - mean) -- skip the separate bias pass.
        gamma, beta = bn
        mean = jnp.mean(y, axis=0)
        var = jnp.var(y, axis=0)   # biased, matches torch BN train normalization
        scale = gamma * jax.lax.rsqrt(var + eps)
        shift = beta - mean * scale
        y = pallas_affine(y, scale, shift, relu=relu, residual=residual)
        return y.reshape(n, oh, ow, cout)
    if bias is not None:
        y = y + bias[None, :]
    if relu:
        y = jnp.maximum(y, 0.0)
    return y.reshape(n, oh, ow, cout)


def maxpool_3x3_s2_p1(x):
    # TODO(synk): plain-JAX reduce_window; not a matmul hot path.
    return jax.lax.reduce_window(
        x, jnp.asarray(-jnp.inf, x.dtype), jax.lax.max,
        window_dimensions=(1, 3, 3, 1), window_strides=(1, 2, 2, 1),
        padding=((0, 0), (1, 1), (1, 1), (0, 0)))


def bilinear_resize_ac(x, out_h, out_w):
    """Bilinear resize with align_corners=True (torch semantics). x: NHWC."""
    N, H, W, C = x.shape

    def coords(in_s, out_s):
        if out_s == 1 or in_s == 1:
            return jnp.zeros((out_s,), jnp.float32)
        return jnp.arange(out_s, dtype=jnp.float32) * ((in_s - 1) / (out_s - 1))

    ys, xs = coords(H, out_h), coords(W, out_w)
    y0 = jnp.floor(ys).astype(jnp.int32)
    y1 = jnp.minimum(y0 + 1, H - 1)
    wy = (ys - y0.astype(jnp.float32))[None, :, None, None]
    x0 = jnp.floor(xs).astype(jnp.int32)
    x1 = jnp.minimum(x0 + 1, W - 1)
    wx = (xs - x0.astype(jnp.float32))[None, None, :, None]
    v = x[:, y0, :, :] * (1.0 - wy) + x[:, y1, :, :] * wy
    return v[:, :, x0, :] * (1.0 - wx) + v[:, :, x1, :] * wx


# ----------------------------------------------------------------------------
# Parameter construction (deterministic, synthetic)
# ----------------------------------------------------------------------------
class KeyGen:
    def __init__(self, key):
        self.key = key
        self.i = 0

    def next(self):
        self.i += 1
        return jax.random.fold_in(self.key, self.i)


def conv_p(kg, kh, kw, cin, cout):
    """Conv weight, pre-reshaped to a (Kp, cout) bf16 matrix (K padded to 128)."""
    std = math.sqrt(2.0 / (kh * kw * cout))
    w = jax.random.normal(kg.next(), (kh, kw, cin, cout), jnp.float32) * std
    K = kh * kw * cin
    Kp = _round_up(K, 128)
    w2 = w.reshape(K, cout).astype(jnp.bfloat16)
    if Kp != K:
        w2 = jnp.pad(w2, ((0, Kp - K), (0, 0)))
    return dict(w2=w2, kh=kh, kw=kw, cin=cin, cout=cout)


def bn_p(c):
    return (jnp.ones((c,), jnp.float32), jnp.zeros((c,), jnp.float32))


def make_bottleneck(kg, inp, planes, stride=1, dilation=1, downsample=False):
    p = dict(w1=conv_p(kg, 1, 1, inp, planes), bn1=bn_p(planes),
             w2=conv_p(kg, 3, 3, planes, planes), bn2=bn_p(planes),
             w3=conv_p(kg, 1, 1, planes, planes * 4), bn3=bn_p(planes * 4),
             stride=stride, dilation=dilation)
    if downsample:
        p['wd'] = conv_p(kg, 1, 1, inp, planes * 4)
        p['bnd'] = bn_p(planes * 4)
    return p


def make_resnet(kg, band_num):
    # ResNet-50, os=8: strides [1,2,1,1], dilations [1,1,2,2], MG blocks [1,2,1]
    params = {'conv1': conv_p(kg, 7, 7, band_num, 64), 'bn1': bn_p(64)}
    inplanes = [64]

    def make_layer(planes, n_blocks, stride, dilation):
        layers = []
        ds = (stride != 1) or (inplanes[0] != planes * 4)
        layers.append(make_bottleneck(kg, inplanes[0], planes, stride, dilation, ds))
        inplanes[0] = planes * 4
        for _ in range(1, n_blocks):
            layers.append(make_bottleneck(kg, inplanes[0], planes, 1, 1, False))
        return layers

    def make_mg(planes, blocks, stride, dilation):
        layers = []
        ds = (stride != 1) or (inplanes[0] != planes * 4)
        layers.append(make_bottleneck(kg, inplanes[0], planes, stride,
                                      blocks[0] * dilation, ds))
        inplanes[0] = planes * 4
        for _ in range(1, len(blocks)):
            layers.append(make_bottleneck(kg, inplanes[0], planes, 1, 1, False))
        return layers

    params['layer1'] = make_layer(64, 3, 1, 1)
    params['layer2'] = make_layer(128, 4, 2, 1)
    params['layer3'] = make_layer(256, 6, 1, 2)
    params['layer4'] = make_mg(512, [1, 2, 1], 1, 2)
    return params


def make_deeplab(kg, num_classes=1, band_num=3):
    p = {'resnet': make_resnet(kg, band_num)}
    for i, d in enumerate([1, 12, 24, 36], start=1):
        k = 1 if d == 1 else 3
        p[f'aspp{i}'] = dict(
            w=conv_p(kg, k, k, 2048, 256),
            b=jax.random.normal(kg.next(), (256,), jnp.float32) * 0.01,
            bn=bn_p(256), dil=d, pad=0 if d == 1 else d)
    p['gap_conv'] = conv_p(kg, 1, 1, 2048, 256)
    p['conv1'] = conv_p(kg, 1, 1, 1280, 256)
    p['bn1'] = bn_p(256)
    p['conv2'] = conv_p(kg, 1, 1, 256, 48)
    p['bn2'] = bn_p(48)
    p['lc1'] = conv_p(kg, 3, 3, 304, 256)
    p['lc1_bn'] = bn_p(256)
    p['lc2'] = conv_p(kg, 3, 3, 256, 256)
    p['lc2_bn'] = bn_p(256)
    p['lc3'] = conv_p(kg, 1, 1, 256, num_classes)
    p['lc3_b'] = jax.random.normal(kg.next(), (num_classes,), jnp.float32) * 0.01
    return p


# ----------------------------------------------------------------------------
# Forward pass
# ----------------------------------------------------------------------------
def bottleneck_fwd(p, x):
    out = conv_block(x, p['w1'], bn=p['bn1'], relu=True)
    out = conv_block(out, p['w2'], stride=p['stride'], dilation=p['dilation'],
                     padding=p['dilation'], bn=p['bn2'], relu=True)
    if 'wd' in p:
        ident = conv_block(x, p['wd'], stride=p['stride'], bn=p['bnd'], relu=False)
    else:
        ident = x.astype(jnp.bfloat16)
    n, h, w, c = ident.shape
    # conv3 + BN + residual add + ReLU fused into a single epilogue kernel.
    out = conv_block(out, p['w3'], bn=p['bn3'], relu=True,
                     residual=ident.reshape(n * h * w, c))
    return out


def resnet_fwd(p, x):
    x = conv_block(x, p['conv1'], stride=2, padding=3, bn=p['bn1'], relu=True)
    x = maxpool_3x3_s2_p1(x)
    for b in p['layer1']:
        x = bottleneck_fwd(b, x)
    low = x
    for b in p['layer2']:
        x = bottleneck_fwd(b, x)
    for b in p['layer3']:
        x = bottleneck_fwd(b, x)
    for b in p['layer4']:
        x = bottleneck_fwd(b, x)
    return x, low


def deeplab_fwd(p, x_nchw):
    x = jnp.transpose(x_nchw, (0, 2, 3, 1)).astype(jnp.float32)  # NCHW -> NHWC
    N, H, W, _ = x.shape
    feat, low = resnet_fwd(p['resnet'], x)

    branches = []
    for i in range(1, 5):
        a = p[f'aspp{i}']
        # conv bias cancels under train-mode BN (handled inside conv_block).
        branches.append(conv_block(feat, a['w'], bias=a['b'], dilation=a['dil'],
                                   padding=a['pad'], bn=a['bn'], relu=True))
    pooled = jnp.mean(feat.astype(jnp.float32), axis=(1, 2))      # (N, 2048)
    x5 = pallas_matmul(pooled.astype(jnp.bfloat16), p['gap_conv']['w2'])
    x5 = x5.reshape(N, 1, 1, 256)
    x5 = bilinear_resize_ac(x5, feat.shape[1], feat.shape[2]).astype(jnp.bfloat16)

    y = jnp.concatenate(branches + [x5], axis=-1)                 # (N, h8, w8, 1280)
    y = conv_block(y, p['conv1'], bn=p['bn1'], relu=True)
    oh, ow = int(math.ceil(H / 4)), int(math.ceil(W / 4))
    y = bilinear_resize_ac(y, oh, ow).astype(jnp.bfloat16)

    low = conv_block(low, p['conv2'], bn=p['bn2'], relu=True)
    y = jnp.concatenate([y, low], axis=-1)                        # (N, oh, ow, 304)

    y = conv_block(y, p['lc1'], padding=1, bn=p['lc1_bn'], relu=True)
    y = conv_block(y, p['lc2'], padding=1, bn=p['lc2_bn'], relu=True)
    y = conv_block(y, p['lc3'], bias=p['lc3_b'])                  # f32
    y = bilinear_resize_ac(y, H, W)
    y = jax.nn.sigmoid(y)
    return jnp.transpose(y, (0, 3, 1, 2))                         # back to NCHW


# ----------------------------------------------------------------------------
if __name__ == "__main__":
    key = jax.random.PRNGKey(0)
    kg = KeyGen(jax.random.fold_in(key, 1))
    params = make_deeplab(kg, num_classes=1, band_num=3)

    x = jax.random.normal(jax.random.fold_in(key, 2), (2, 3, 32, 32), jnp.float32)
    out = deeplab_fwd(params, x)
    out = jax.block_until_ready(out)

    assert out.shape == (2, 1, 32, 32), out.shape
    assert bool(jnp.all(jnp.isfinite(out)))
    assert bool(jnp.all((out >= 0.0) & (out <= 1.0)))
    print("KERNEL_OK")
</pallas_src>

<mosaic_0001>
module attributes {stable_mosaic.version = 11 : i64} {
  func.func @_matmul_kernel(%arg0: i32, %arg1: i32, %arg2: i32, %arg3: memref<512x256xbf16, #tpu.memory_space<vmem>>, %arg4: memref<256x64xbf16, #tpu.memory_space<vmem>>, %arg5: memref<512x64xf32, #tpu.memory_space<vmem>>) attributes {dimension_semantics = [#tpu.dimension_semantics<parallel>, #tpu.dimension_semantics<parallel>, #tpu.dimension_semantics<arbitrary>], iteration_bounds = array<i64: 1, 1, 1>, scalar_prefetch = 0 : i64, scratch_operands = 0 : i64, tpu.core_type = #tpu.core_type<tc>, window_params = [{transform_indices = @transform_0, window_bounds = array<i64: 512, 256>}, {transform_indices = @transform_1, window_bounds = array<i64: 256, 64>}, {transform_indices = @transform_2, window_bounds = array<i64: 512, 64>}]} {
    %c0_i32 = arith.constant 0 : i32
    %0 = arith.cmpi eq, %arg2, %c0_i32 : i32
    %1 = arith.extui %0 : i1 to i32
    %c0_i32_0 = arith.constant 0 : i32
    %2 = arith.cmpi ne, %1, %c0_i32_0 : i32
    scf.if %2 {
      %cst_8 = arith.constant 0.000000e+00 : f32
      %9 = vector.broadcast %cst_8 : f32 to vector<512x64xf32>
      %c0_9 = arith.constant 0 : index
      %c0_10 = arith.constant 0 : index
      %10 = vector.load %arg5[%c0_9, %c0_10] : memref<512x64xf32, #tpu.memory_space<vmem>>, vector<512x64xf32>
      tpu.vector_store %arg5[%c0_9, %c0_10], %9 {strides = array<i32>} : memref<512x64xf32, #tpu.memory_space<vmem>>, vector<512x64xf32>,
    } else {
    }
    %c0 = arith.constant 0 : index
    %c0_1 = arith.constant 0 : index
    %3 = vector.load %arg5[%c0, %c0_1] : memref<512x64xf32, #tpu.memory_space<vmem>>, vector<512x64xf32>
    %c0_2 = arith.constant 0 : index
    %c0_3 = arith.constant 0 : index
    %4 = vector.load %arg3[%c0_2, %c0_3] : memref<512x256xbf16, #tpu.memory_space<vmem>>, vector<512x256xbf16>
    %c0_4 = arith.constant 0 : index
    %c0_5 = arith.constant 0 : index
    %5 = vector.load %arg4[%c0_4, %c0_5] : memref<256x64xbf16, #tpu.memory_space<vmem>>, vector<256x64xbf16>
    %cst = arith.constant dense<0.000000e+00> : vector<512x64xf32>
    %6 = tpu.matmul %4, %5, %cst {dimension_numbers = #tpu.dot_dimension_numbers<[1], [0], [0], [1], [0, 0, 1, 1], [], []>} : vector<512x256xbf16>, vector<256x64xbf16>, vector<512x64xf32> -> vector<512x64xf32>
    %7 = arith.addf %3, %6 : vector<512x64xf32>
    %c0_6 = arith.constant 0 : index
    %c0_7 = arith.constant 0 : index
    %8 = vector.load %arg5[%c0_6, %c0_7] : memref<512x64xf32, #tpu.memory_space<vmem>>, vector<512x64xf32>
    tpu.vector_store %arg5[%c0_6, %c0_7], %7 {strides = array<i32>} : memref<512x64xf32, #tpu.memory_space<vmem>>, vector<512x64xf32>,
    return
  }
  func.func @transform_0(%arg0: i32, %arg1: i32, %arg2: i32) -> (i32, i32) {
    %c0_i32 = arith.constant 0 : i32
    return %arg0, %arg2 : i32, i32
  }
  func.func @transform_1(%arg0: i32, %arg1: i32, %arg2: i32) -> (i32, i32) {
    %c0_i32 = arith.constant 0 : i32
    return %arg2, %arg1 : i32, i32
  }
  func.func @transform_2(%arg0: i32, %arg1: i32, %arg2: i32) -> (i32, i32) {
    %c0_i32 = arith.constant 0 : i32
    return %arg0, %arg1 : i32, i32
  }
}

</mosaic_0001>

<llo_original>
// kernel: tpu_custom_call.1
$region0: #{tpu_custom_call.1}
  #allocation0 [shape = 'u32[]', space=smem, size = 0x4, offset = 0x4, fixed_abs, tag = 'smem constant byte address 0x4 - core index']
  #allocation1 [shape = 'u32[144,128]{1,0:T(1,128)}', space=vmem, size = 0x12000, scoped, tag = 'internal scratch']
  %s0 = inlined_call_operand.hbm [shape: bf16[512,256], index: 0, kind: input, shape index: {}]
  %s1 = inlined_call_operand.vmem [shape: bf16[256,64], index: 1, kind: input, shape index: {}]
  %s2 = inlined_call_operand.vmem [shape: f32[512,64], index: 2, kind: output, shape index: {}]
  %s3 = sld [smem:[#allocation0]]
  $region26: #{tpu_custom_call.1} parent=0
    _
  %s5 = ssub.s32 1, %s3
  %s6 = scalar_select 0, %s5, %s3
  $region1: #{tpu_custom_call.1} parent=0
    #allocation2 [shape = 'u8[262144]{0}', space=vmem, size = 0x40000, scoped, tag = 'input window, operand 0, single buffered']
    #allocation3 [shape = 's32[1]{0}', space=sflag, size = 0x4, scoped, tag = 'scoped memory for tpu_custom_call.1']
    %7 = vsyncpa [#allocation3], 0
    // Predicated region
    $region2: #{tpu_custom_call.1} parent=1 // pred_check
      _
    $region3: #{tpu_custom_call.1} parent=1 // pred_check_branch
      %9 = sbr.rel (0) target = $region5
    $region4: #{tpu_custom_call.1} parent=1 // pred_region
      %s11 = ssub.s32 8192, 8192
      %12 = vsyncadd [#allocation3], %s11
      %s13 = sshll.u32 [#allocation2], 4
      %s14 = int_to_ptr.vmem [resolvable:$true] %s13
      %19 = dma.hbm_to_vmem [thread:$0]  %s0, 8192, %s14, [#allocation3], 128, 128, 8
    $region5: #{tpu_custom_call.1} parent=1 // pred_fallthru
      _
    // Predicated region
    $region6: #{tpu_custom_call.1} parent=1 // pred_check
      _
    $region7: #{tpu_custom_call.1} parent=1 // pred_check_branch
      %21 = sbr.rel (0) target = $region9
    $region8: #{tpu_custom_call.1} parent=1 // pred_region
      _
    $region9: #{tpu_custom_call.1} parent=1 // pred_fallthru
      _
    // Predicated region
    $region10: #{tpu_custom_call.1} parent=1 // pred_check
      _
    $region11: #{tpu_custom_call.1} parent=1 // pred_check_branch
      %23 = sbr.rel (0) target = $region13
    $region12: #{tpu_custom_call.1} parent=1 // pred_region
      %24 = dma.done [#allocation3], 8192
    $region13: #{tpu_custom_call.1} parent=1 // pred_fallthru
      _
    %p26 = scmp.eq.s32.totalorder 0, 0
    // Predicated region
    $region14: #{tpu_custom_call.1} parent=1 // pred_check
      %p27 = pneg %p26
    $region15: #{tpu_custom_call.1} parent=1 // pred_check_branch
      %29 = sbr.rel (%p27) target = $region17
    $region16: #{tpu_custom_call.1} parent=1 // pred_region
      %vm30 = vcmask 523264
      %31 = vst.msk [vmem:[%s2] sm:$0xff] %vm30, 0.0
      %32 = vst.msk [vmem:[%s2 + $0x8] sm:$0xff] %vm30, 0.0
      %33 = vst.msk [vmem:[%s2 + $0x10] sm:$0xff] %vm30, 0.0
      %34 = vst.msk [vmem:[%s2 + $0x18] sm:$0xff] %vm30, 0.0
      %35 = vst.msk [vmem:[%s2 + $0x20] sm:$0xff] %vm30, 0.0
      %36 = vst.msk [vmem:[%s2 + $0x28] sm:$0xff] %vm30, 0.0
      %37 = vst.msk [vmem:[%s2 + $0x30] sm:$0xff] %vm30, 0.0
      %38 = vst.msk [vmem:[%s2 + $0x38] sm:$0xff] %vm30, 0.0
      %39 = vst.msk [vmem:[%s2 + $0x40] sm:$0xff] %vm30, 0.0
      %40 = vst.msk [vmem:[%s2 + $0x48] sm:$0xff] %vm30, 0.0
      %41 = vst.msk [vmem:[%s2 + $0x50] sm:$0xff] %vm30, 0.0
      %42 = vst.msk [vmem:[%s2 + $0x58] sm:$0xff] %vm30, 0.0
      %43 = vst.msk [vmem:[%s2 + $0x60] sm:$0xff] %vm30, 0.0
      %44 = vst.msk [vmem:[%s2 + $0x68] sm:$0xff] %vm30, 0.0
      %45 = vst.msk [vmem:[%s2 + $0x70] sm:$0xff] %vm30, 0.0
      %46 = vst.msk [vmem:[%s2 + $0x78] sm:$0xff] %vm30, 0.0
      %47 = vst.msk [vmem:[%s2 + $0x80] sm:$0xff] %vm30, 0.0
      %48 = vst.msk [vmem:[%s2 + $0x88] sm:$0xff] %vm30, 0.0
      %49 = vst.msk [vmem:[%s2 + $0x90] sm:$0xff] %vm30, 0.0
      %50 = vst.msk [vmem:[%s2 + $0x98] sm:$0xff] %vm30, 0.0
      %51 = vst.msk [vmem:[%s2 + $0xa0] sm:$0xff] %vm30, 0.0
      %52 = vst.msk [vmem:[%s2 + $0xa8] sm:$0xff] %vm30, 0.0
      %53 = vst.msk [vmem:[%s2 + $0xb0] sm:$0xff] %vm30, 0.0
      %54 = vst.msk [vmem:[%s2 + $0xb8] sm:$0xff] %vm30, 0.0
      %55 = vst.msk [vmem:[%s2 + $0xc0] sm:$0xff] %vm30, 0.0
      %56 = vst.msk [vmem:[%s2 + $0xc8] sm:$0xff] %vm30, 0.0
      %57 = vst.msk [vmem:[%s2 + $0xd0] sm:$0xff] %vm30, 0.0
      %58 = vst.msk [vmem:[%s2 + $0xd8] sm:$0xff] %vm30, 0.0
      %59 = vst.msk [vmem:[%s2 + $0xe0] sm:$0xff] %vm30, 0.0
      %60 = vst.msk [vmem:[%s2 + $0xe8] sm:$0xff] %vm30, 0.0
      %61 = vst.msk [vmem:[%s2 + $0xf0] sm:$0xff] %vm30, 0.0
      %62 = vst.msk [vmem:[%s2 + $0xf8] sm:$0xff] %vm30, 0.0
      %63 = vst.msk [vmem:[%s2 + $0x100] sm:$0xff] %vm30, 0.0
      %64 = vst.msk [vmem:[%s2 + $0x108] sm:$0xff] %vm30, 0.0
      %65 = vst.msk [vmem:[%s2 + $0x110] sm:$0xff] %vm30, 0.0
      %66 = vst.msk [vmem:[%s2 + $0x118] sm:$0xff] %vm30, 0.0
      %67 = vst.msk [vmem:[%s2 + $0x120] sm:$0xff] %vm30, 0.0
      %68 = vst.msk [vmem:[%s2 + $0x128] sm:$0xff] %vm30, 0.0
      %69 = vst.msk [vmem:[%s2 + $0x130] sm:$0xff] %vm30, 0.0
      %70 = vst.msk [vmem:[%s2 + $0x138] sm:$0xff] %vm30, 0.0
      %71 = vst.msk [vmem:[%s2 + $0x140] sm:$0xff] %vm30, 0.0
      %72 = vst.msk [vmem:[%s2 + $0x148] sm:$0xff] %vm30, 0.0
      %73 = vst.msk [vmem:[%s2 + $0x150] sm:$0xff] %vm30, 0.0
      %74 = vst.msk [vmem:[%s2 + $0x158] sm:$0xff] %vm30, 0.0
      %75 = vst.msk [vmem:[%s2 + $0x160] sm:$0xff] %vm30, 0.0
      %76 = vst.msk [vmem:[%s2 + $0x168] sm:$0xff] %vm30, 0.0
      %77 = vst.msk [vmem:[%s2 + $0x170] sm:$0xff] %vm30, 0.0
      %78 = vst.msk [vmem:[%s2 + $0x178] sm:$0xff] %vm30, 0.0
      %79 = vst.msk [vmem:[%s2 + $0x180] sm:$0xff] %vm30, 0.0
      %80 = vst.msk [vmem:[%s2 + $0x188] sm:$0xff] %vm30, 0.0
      %81 = vst.msk [vmem:[%s2 + $0x190] sm:$0xff] %vm30, 0.0
      %82 = vst.msk [vmem:[%s2 + $0x198] sm:$0xff] %vm30, 0.0
      %83 = vst.msk [vmem:[%s2 + $0x1a0] sm:$0xff] %vm30, 0.0
      %84 = vst.msk [vmem:[%s2 + $0x1a8] sm:$0xff] %vm30, 0.0
      %85 = vst.msk [vmem:[%s2 + $0x1b0] sm:$0xff] %vm30, 0.0
      %86 = vst.msk [vmem:[%s2 + $0x1b8] sm:$0xff] %vm30, 0.0
      %87 = vst.msk [vmem:[%s2 + $0x1c0] sm:$0xff] %vm30, 0.0
      %88 = vst.msk [vmem:[%s2 + $0x1c8] sm:$0xff] %vm30, 0.0
      %89 = vst.msk [vmem:[%s2 + $0x1d0] sm:$0xff] %vm30, 0.0
      %90 = vst.msk [vmem:[%s2 + $0x1d8] sm:$0xff] %vm30, 0.0
      %91 = vst.msk [vmem:[%s2 + $0x1e0] sm:$0xff] %vm30, 0.0
      %92 = vst.msk [vmem:[%s2 + $0x1e8] sm:$0xff] %vm30, 0.0
      %93 = vst.msk [vmem:[%s2 + $0x1f0] sm:$0xff] %vm30, 0.0
      %94 = vst.msk [vmem:[%s2 + $0x1f8] sm:$0xff] %vm30, 0.0
    $region17: #{tpu_custom_call.1} parent=1 // pred_fallthru
      _
    %v95 = vld [vmem:[%s2] sm:$0xff]
    %v96 = vld [vmem:[%s2 + $0x8] sm:$0xff]
    %v97 = vld [vmem:[%s2 + $0x10] sm:$0xff]
    %v98 = vld [vmem:[%s2 + $0x18] sm:$0xff]
    %v99 = vld [vmem:[%s2 + $0x20] sm:$0xff]
    %v100 = vld [vmem:[%s2 + $0x28] sm:$0xff]
    %v101 = vld [vmem:[%s2 + $0x30] sm:$0xff]
    %v102 = vld [vmem:[%s2 + $0x38] sm:$0xff]
    %v103 = vld [vmem:[%s2 + $0x40] sm:$0xff]
    %v104 = vld [vmem:[%s2 + $0x48] sm:$0xff]
    %v105 = vld [vmem:[%s2 + $0x50] sm:$0xff]
    %v106 = vld [vmem:[%s2 + $0x58] sm:$0xff]
    %v107 = vld [vmem:[%s2 + $0x60] sm:$0xff]
    %v108 = vld [vmem:[%s2 + $0x68] sm:$0xff]
    %v109 = vld [vmem:[%s2 + $0x70] sm:$0xff]
    %v110 = vld [vmem:[%s2 + $0x78] sm:$0xff]
    %v111 = vld [vmem:[%s2 + $0x80] sm:$0xff]
    %v112 = vld [vmem:[%s2 + $0x88] sm:$0xff]
    %v113 = vld [vmem:[%s2 + $0x90] sm:$0xff]
    %v114 = vld [vmem:[%s2 + $0x98] sm:$0xff]
    %v115 = vld [vmem:[%s2 + $0xa0] sm:$0xff]
    %v116 = vld [vmem:[%s2 + $0xa8] sm:$0xff]
    %v117 = vld [vmem:[%s2 + $0xb0] sm:$0xff]
    %v118 = vld [vmem:[%s2 + $0xb8] sm:$0xff]
    %v119 = vld [vmem:[%s2 + $0xc0] sm:$0xff]
    %v120 = vld [vmem:[%s2 + $0xc8] sm:$0xff]
    %v121 = vld [vmem:[%s2 + $0xd0] sm:$0xff]
    %v122 = vld [vmem:[%s2 + $0xd8] sm:$0xff]
    %v123 = vld [vmem:[%s2 + $0xe0] sm:$0xff]
    %v124 = vld [vmem:[%s2 + $0xe8] sm:$0xff]
    %v125 = vld [vmem:[%s2 + $0xf0] sm:$0xff]
    %v126 = vld [vmem:[%s2 + $0xf8] sm:$0xff]
    %v127 = vld [vmem:[%s2 + $0x100] sm:$0xff]
    %v128 = vld [vmem:[%s2 + $0x108] sm:$0xff]
    %v129 = vld [vmem:[%s2 + $0x110] sm:$0xff]
    %v130 = vld [vmem:[%s2 + $0x118] sm:$0xff]
    %v131 = vld [vmem:[%s2 + $0x120] sm:$0xff]
    %v132 = vld [vmem:[%s2 + $0x128] sm:$0xff]
    %v133 = vld [vmem:[%s2 + $0x130] sm:$0xff]
    %v134 = vld [vmem:[%s2 + $0x138] sm:$0xff]
    %v135 = vld [vmem:[%s2 + $0x140] sm:$0xff]
    %v136 = vld [vmem:[%s2 + $0x148] sm:$0xff]
    %v137 = vld [vmem:[%s2 + $0x150] sm:$0xff]
    %v138 = vld [vmem:[%s2 + $0x158] sm:$0xff]
    %v139 = vld [vmem:[%s2 + $0x160] sm:$0xff]
    %v140 = vld [vmem:[%s2 + $0x168] sm:$0xff]
    %v141 = vld [vmem:[%s2 + $0x170] sm:$0xff]
    %v142 = vld [vmem:[%s2 + $0x178] sm:$0xff]
    %v143 = vld [vmem:[%s2 + $0x180] sm:$0xff]
    %v144 = vld [vmem:[%s2 + $0x188] sm:$0xff]
    %v145 = vld [vmem:[%s2 + $0x190] sm:$0xff]
    %v146 = vld [vmem:[%s2 + $0x198] sm:$0xff]
    %v147 = vld [vmem:[%s2 + $0x1a0] sm:$0xff]
    %v148 = vld [vmem:[%s2 + $0x1a8] sm:$0xff]
    %v149 = vld [vmem:[%s2 + $0x1b0] sm:$0xff]
    %v150 = vld [vmem:[%s2 + $0x1b8] sm:$0xff]
    %v151 = vld [vmem:[%s2 + $0x1c0] sm:$0xff]
    %v152 = vld [vmem:[%s2 + $0x1c8] sm:$0xff]
    %v153 = vld [vmem:[%s2 + $0x1d0] sm:$0xff]
    %v154 = vld [vmem:[%s2 + $0x1d8] sm:$0xff]
    %v155 = vld [vmem:[%s2 + $0x1e0] sm:$0xff]
    %v156 = vld [vmem:[%s2 + $0x1e8] sm:$0xff]
    %v157 = vld [vmem:[%s2 + $0x1f0] sm:$0xff]
    %v158 = vld [vmem:[%s2 + $0x1f8] sm:$0xff]
    %v159 = vld [vmem:[#allocation2] sm:$0xff]
    %v160 = vld [vmem:[#allocation2 + $0x8] sm:$0xff]
    %v161 = vld [vmem:[#allocation2 + $0x10] sm:$0xff]
    %v162 = vld [vmem:[#allocation2 + $0x18] sm:$0xff]
    %v163 = vld [vmem:[#allocation2 + $0x20] sm:$0xff]
    %v164 = vld [vmem:[#allocation2 + $0x28] sm:$0xff]
    %v165 = vld [vmem:[#allocation2 + $0x30] sm:$0xff]
    %v166 = vld [vmem:[#allocation2 + $0x38] sm:$0xff]
    %v167 = vld [vmem:[#allocation2 + $0x40] sm:$0xff]
    %v168 = vld [vmem:[#allocation2 + $0x48] sm:$0xff]
    %v169 = vld [vmem:[#allocation2 + $0x50] sm:$0xff]
    %v170 = vld [vmem:[#allocation2 + $0x58] sm:$0xff]
    %v171 = vld [vmem:[#allocation2 + $0x60] sm:$0xff]
    %v172 = vld [vmem:[#allocation2 + $0x68] sm:$0xff]
    %v173 = vld [vmem:[#allocation2 + $0x70] sm:$0xff]
    %v174 = vld [vmem:[#allocation2 + $0x78] sm:$0xff]
    %v175 = vld [vmem:[#allocation2 + $0x80] sm:$0xff]
    %v176 = vld [vmem:[#allocation2 + $0x88] sm:$0xff]
    %v177 = vld [vmem:[#allocation2 + $0x90] sm:$0xff]
    %v178 = vld [vmem:[#allocation2 + $0x98] sm:$0xff]
    %v179 = vld [vmem:[#allocation2 + $0xa0] sm:$0xff]
    %v180 = vld [vmem:[#allocation2 + $0xa8] sm:$0xff]
    %v181 = vld [vmem:[#allocation2 + $0xb0] sm:$0xff]
    %v182 = vld [vmem:[#allocation2 + $0xb8] sm:$0xff]
    %v183 = vld [vmem:[#allocation2 + $0xc0] sm:$0xff]
    %v184 = vld [vmem:[#allocation2 + $0xc8] sm:$0xff]
    %v185 = vld [vmem:[#allocation2 + $0xd0] sm:$0xff]
    %v186 = vld [vmem:[#allocation2 + $0xd8] sm:$0xff]
    %v187 = vld [vmem:[#allocation2 + $0xe0] sm:$0xff]
    %v188 = vld [vmem:[#allocation2 + $0xe8] sm:$0xff]
    %v189 = vld [vmem:[#allocation2 + $0xf0] sm:$0xff]
    %v190 = vld [vmem:[#allocation2 + $0xf8] sm:$0xff]
    %v191 = vld [vmem:[#allocation2 + $0x100] sm:$0xff]
    %v192 = vld [vmem:[#allocation2 + $0x108] sm:$0xff]
    %v193 = vld [vmem:[#allocation2 + $0x110] sm:$0xff]
    %v194 = vld [vmem:[#allocation2 + $0x118] sm:$0xff]
    %v195 = vld [vmem:[#allocation2 + $0x120] sm:$0xff]
    %v196 = vld [vmem:[#allocation2 + $0x128] sm:$0xff]
    %v197 = vld [vmem:[#allocation2 + $0x130] sm:$0xff]
    %v198 = vld [vmem:[#allocation2 + $0x138] sm:$0xff]
    %v199 = vld [vmem:[#allocation2 + $0x140] sm:$0xff]
    %v200 = vld [vmem:[#allocation2 + $0x148] sm:$0xff]
    %v201 = vld [vmem:[#allocation2 + $0x150] sm:$0xff]
    %v202 = vld [vmem:[#allocation2 + $0x158] sm:$0xff]
    %v203 = vld [vmem:[#allocation2 + $0x160] sm:$0xff]
    %v204 = vld [vmem:[#allocation2 + $0x168] sm:$0xff]
    %v205 = vld [vmem:[#allocation2 + $0x170] sm:$0xff]
    %v206 = vld [vmem:[#allocation2 + $0x178] sm:$0xff]
    %v207 = vld [vmem:[#allocation2 + $0x180] sm:$0xff]
    %v208 = vld [vmem:[#allocation2 + $0x188] sm:$0xff]
    %v209 = vld [vmem:[#allocation2 + $0x190] sm:$0xff]
    %v210 = vld [vmem:[#allocation2 + $0x198] sm:$0xff]
    %v211 = vld [vmem:[#allocation2 + $0x1a0] sm:$0xff]
    %v212 = vld [vmem:[#allocation2 + $0x1a8] sm:$0xff]
    %v213 = vld [vmem:[#allocation2 + $0x1b0] sm:$0xff]
    %v214 = vld [vmem:[#allocation2 + $0x1b8] sm:$0xff]
    %v215 = vld [vmem:[#allocation2 + $0x1c0] sm:$0xff]
    %v216 = vld [vmem:[#allocation2 + $0x1c8] sm:$0xff]
    %v217 = vld [vmem:[#allocation2 + $0x1d0] sm:$0xff]
    %v218 = vld [vmem:[#allocation2 + $0x1d8] sm:$0xff]
    %v219 = vld [vmem:[#allocation2 + $0x1e0] sm:$0xff]
    %v220 = vld [vmem:[#allocation2 + $0x1e8] sm:$0xff]
    %v221 = vld [vmem:[#allocation2 + $0x1f0] sm:$0xff]
    %v222 = vld [vmem:[#allocation2 + $0x1f8] sm:$0xff]
    %v223 = vld [vmem:[%s1] sm:$0xf]
    %v224 = vld [vmem:[%s1 + $0x4] sm:$0xf]
    %v225 = vld [vmem:[%s1 + $0x8] sm:$0xf]
    %v226 = vld [vmem:[%s1 + $0xc] sm:$0xf]
    %v227 = vld [vmem:[%s1 + $0x10] sm:$0xf]
    %v228 = vld [vmem:[%s1 + $0x14] sm:$0xf]
    %v229 = vld [vmem:[%s1 + $0x18] sm:$0xf]
    %v230 = vld [vmem:[%s1 + $0x1c] sm:$0xf]
    %v231 = vld [vmem:[%s1 + $0x20] sm:$0xf]
    %v232 = vld [vmem:[%s1 + $0x24] sm:$0xf]
    %v233 = vld [vmem:[%s1 + $0x28] sm:$0xf]
    %v234 = vld [vmem:[%s1 + $0x2c] sm:$0xf]
    %v235 = vld [vmem:[%s1 + $0x30] sm:$0xf]
    %v236 = vld [vmem:[%s1 + $0x34] sm:$0xf]
    %v237 = vld [vmem:[%s1 + $0x38] sm:$0xf]
    %v238 = vld [vmem:[%s1 + $0x3c] sm:$0xf]
    %v239 = vld [vmem:[%s1 + $0x40] sm:$0xf]
    %v240 = vld [vmem:[%s1 + $0x44] sm:$0xf]
    %v241 = vld [vmem:[%s1 + $0x48] sm:$0xf]
    %v242 = vld [vmem:[%s1 + $0x4c] sm:$0xf]
    %v243 = vld [vmem:[%s1 + $0x50] sm:$0xf]
    %v244 = vld [vmem:[%s1 + $0x54] sm:$0xf]
    %v245 = vld [vmem:[%s1 + $0x58] sm:$0xf]
    %v246 = vld [vmem:[%s1 + $0x5c] sm:$0xf]
    %v247 = vld [vmem:[%s1 + $0x60] sm:$0xf]
    %v248 = vld [vmem:[%s1 + $0x64] sm:$0xf]
    %v249 = vld [vmem:[%s1 + $0x68] sm:$0xf]
    %v250 = vld [vmem:[%s1 + $0x6c] sm:$0xf]
    %v251 = vld [vmem:[%s1 + $0x70] sm:$0xf]
    %v252 = vld [vmem:[%s1 + $0x74] sm:$0xf]
    %v253 = vld [vmem:[%s1 + $0x78] sm:$0xf]
    %v254 = vld [vmem:[%s1 + $0x7c] sm:$0xf]
    %v319 = vunpack.c.l.b16 %v159
    %v320 = vunpack.c.h.b16 %v159
    %v321 = vunpack.c.l.b16 %v160
    %v322 = vunpack.c.h.b16 %v160
    %v323 = vunpack.c.l.b16 %v161
    %v324 = vunpack.c.h.b16 %v161
    %v325 = vunpack.c.l.b16 %v162
    %v326 = vunpack.c.h.b16 %v162
    %v327 = vunpack.c.l.b16 %v163
    %v328 = vunpack.c.h.b16 %v163
    %v329 = vunpack.c.l.b16 %v164
    %v330 = vunpack.c.h.b16 %v164
    %v331 = vunpack.c.l.b16 %v165
    %v332 = vunpack.c.h.b16 %v165
    %v333 = vunpack.c.l.b16 %v166
    %v334 = vunpack.c.h.b16 %v166
    %v335 = vunpack.c.l.b16 %v167
    %v336 = vunpack.c.h.b16 %v167
    %v337 = vunpack.c.l.b16 %v168
    %v338 = vunpack.c.h.b16 %v168
    %v339 = vunpack.c.l.b16 %v169
    %v340 = vunpack.c.h.b16 %v169
    %v341 = vunpack.c.l.b16 %v170
    %v342 = vunpack.c.h.b16 %v170
    %v343 = vunpack.c.l.b16 %v171
    %v344 = vunpack.c.h.b16 %v171
    %v345 = vunpack.c.l.b16 %v172
    %v346 = vunpack.c.h.b16 %v172
    %v347 = vunpack.c.l.b16 %v173
    %v348 = vunpack.c.h.b16 %v173
    %v349 = vunpack.c.l.b16 %v174
    %v350 = vunpack.c.h.b16 %v174
    %v351 = vunpack.c.l.b16 %v175
    %v352 = vunpack.c.h.b16 %v175
    %v353 = vunpack.c.l.b16 %v176
    %v354 = vunpack.c.h.b16 %v176
    %v355 = vunpack.c.l.b16 %v177
    %v356 = vunpack.c.h.b16 %v177
    %v357 = vunpack.c.l.b16 %v178
    %v358 = vunpack.c.h.b16 %v178
    %v359 = vunpack.c.l.b16 %v179
    %v360 = vunpack.c.h.b16 %v179
    %v361 = vunpack.c.l.b16 %v180
    %v362 = vunpack.c.h.b16 %v180
    %v363 = vunpack.c.l.b16 %v181
    %v364 = vunpack.c.h.b16 %v181
    %v365 = vunpack.c.l.b16 %v182
    %v366 = vunpack.c.h.b16 %v182
    %v367 = vunpack.c.l.b16 %v183
    %v368 = vunpack.c.h.b16 %v183
    %v369 = vunpack.c.l.b16 %v184
    %v370 = vunpack.c.h.b16 %v184
    %v371 = vunpack.c.l.b16 %v185
    %v372 = vunpack.c.h.b16 %v185
    %v373 = vunpack.c.l.b16 %v186
    %v374 = vunpack.c.h.b16 %v186
    %v375 = vunpack.c.l.b16 %v187
    %v376 = vunpack.c.h.b16 %v187
    %v377 = vunpack.c.l.b16 %v188
    %v378 = vunpack.c.h.b16 %v188
    %v379 = vunpack.c.l.b16 %v189
    %v380 = vunpack.c.h.b16 %v189
    %v381 = vunpack.c.l.b16 %v190
    %v382 = vunpack.c.h.b16 %v190
    %v383 = vunpack.c.l.b16 %v191
    %v384 = vunpack.c.h.b16 %v191
    %v385 = vunpack.c.l.b16 %v192
    %v386 = vunpack.c.h.b16 %v192
    %v387 = vunpack.c.l.b16 %v193
    %v388 = vunpack.c.h.b16 %v193
    %v389 = vunpack.c.l.b16 %v194
    %v390 = vunpack.c.h.b16 %v194
    %v391 = vunpack.c.l.b16 %v195
    %v392 = vunpack.c.h.b16 %v195
    %v393 = vunpack.c.l.b16 %v196
    %v394 = vunpack.c.h.b16 %v196
    %v395 = vunpack.c.l.b16 %v197
    %v396 = vunpack.c.h.b16 %v197
    %v397 = vunpack.c.l.b16 %v198
    %v398 = vunpack.c.h.b16 %v198
    %v399 = vunpack.c.l.b16 %v199
    %v400 = vunpack.c.h.b16 %v199
    %v401 = vunpack.c.l.b16 %v200
    %v402 = vunpack.c.h.b16 %v200
    %v403 = vunpack.c.l.b16 %v201
    %v404 = vunpack.c.h.b16 %v201
    %v405 = vunpack.c.l.b16 %v202
    %v406 = vunpack.c.h.b16 %v202
    %v407 = vunpack.c.l.b16 %v203
    %v408 = vunpack.c.h.b16 %v203
    %v409 = vunpack.c.l.b16 %v204
    %v410 = vunpack.c.h.b16 %v204
    %v411 = vunpack.c.l.b16 %v205
    %v412 = vunpack.c.h.b16 %v205
    %v413 = vunpack.c.l.b16 %v206
    %v414 = vunpack.c.h.b16 %v206
    %v415 = vunpack.c.l.b16 %v207
    %v416 = vunpack.c.h.b16 %v207
    %v417 = vunpack.c.l.b16 %v208
    %v418 = vunpack.c.h.b16 %v208
    %v419 = vunpack.c.l.b16 %v209
    %v420 = vunpack.c.h.b16 %v209
    %v421 = vunpack.c.l.b16 %v210
    %v422 = vunpack.c.h.b16 %v210
    %v423 = vunpack.c.l.b16 %v211
    %v424 = vunpack.c.h.b16 %v211
    %v425 = vunpack.c.l.b16 %v212
    %v426 = vunpack.c.h.b16 %v212
    %v427 = vunpack.c.l.b16 %v213
    %v428 = vunpack.c.h.b16 %v213
    %v429 = vunpack.c.l.b16 %v214
    %v430 = vunpack.c.h.b16 %v214
    %v431 = vunpack.c.l.b16 %v215
    %v432 = vunpack.c.h.b16 %v215
    %v433 = vunpack.c.l.b16 %v216
    %v434 = vunpack.c.h.b16 %v216
    %v435 = vunpack.c.l.b16 %v217
    %v436 = vunpack.c.h.b16 %v217
    %v437 = vunpack.c.l.b16 %v218
    %v438 = vunpack.c.h.b16 %v218
    %v439 = vunpack.c.l.b16 %v219
    %v440 = vunpack.c.h.b16 %v219
    %v441 = vunpack.c.l.b16 %v220
    %v442 = vunpack.c.h.b16 %v220
    %v443 = vunpack.c.l.b16 %v221
    %v444 = vunpack.c.h.b16 %v221
    %v445 = vunpack.c.l.b16 %v222
    %v446 = vunpack.c.h.b16 %v222
    %v447 = vpack.c.b16 %v321, %v319
    %v448 = vpack.c.b16 %v322, %v320
    %v449 = vpack.c.b16 %v325, %v323
    %v450 = vpack.c.b16 %v326, %v324
    %v451 = vpack.c.b16 %v329, %v327
    %v452 = vpack.c.b16 %v330, %v328
    %v453 = vpack.c.b16 %v333, %v331
    %v454 = vpack.c.b16 %v334, %v332
    %v455 = vpack.c.b16 %v337, %v335
    %v456 = vpack.c.b16 %v338, %v336
    %v457 = vpack.c.b16 %v341, %v339
    %v458 = vpack.c.b16 %v342, %v340
    %v459 = vpack.c.b16 %v345, %v343
    %v460 = vpack.c.b16 %v346, %v344
    %v461 = vpack.c.b16 %v349, %v347
    %v462 = vpack.c.b16 %v350, %v348
    %v463 = vpack.c.b16 %v353, %v351
    %v464 = vpack.c.b16 %v354, %v352
    %v465 = vpack.c.b16 %v357, %v355
    %v466 = vpack.c.b16 %v358, %v356
    %v467 = vpack.c.b16 %v361, %v359
    %v468 = vpack.c.b16 %v362, %v360
    %v469 = vpack.c.b16 %v365, %v363
    %v470 = vpack.c.b16 %v366, %v364
    %v471 = vpack.c.b16 %v369, %v367
    %v472 = vpack.c.b16 %v370, %v368
    %v473 = vpack.c.b16 %v373, %v371
    %v474 = vpack.c.b16 %v374, %v372
    %v475 = vpack.c.b16 %v377, %v375
    %v476 = vpack.c.b16 %v378, %v376
    %v477 = vpack.c.b16 %v381, %v379
    %v478 = vpack.c.b16 %v382, %v380
    %v479 = vpack.c.b16 %v385, %v383
    %v480 = vpack.c.b16 %v386, %v384
    %v481 = vpack.c.b16 %v389, %v387
    %v482 = vpack.c.b16 %v390, %v388
    %v483 = vpack.c.b16 %v393, %v391
    %v484 = vpack.c.b16 %v394, %v392
    %v485 = vpack.c.b16 %v397, %v395
    %v486 = vpack.c.b16 %v398, %v396
    %v487 = vpack.c.b16 %v401, %v399
    %v488 = vpack.c.b16 %v402, %v400
    %v489 = vpack.c.b16 %v405, %v403
    %v490 = vpack.c.b16 %v406, %v404
    %v491 = vpack.c.b16 %v409, %v407
    %v492 = vpack.c.b16 %v410, %v408
    %v493 = vpack.c.b16 %v413, %v411
    %v494 = vpack.c.b16 %v414, %v412
    %v495 = vpack.c.b16 %v417, %v415
    %v496 = vpack.c.b16 %v418, %v416
    %v497 = vpack.c.b16 %v421, %v419
    %v498 = vpack.c.b16 %v422, %v420
    %v499 = vpack.c.b16 %v425, %v423
    %v500 = vpack.c.b16 %v426, %v424
    %v501 = vpack.c.b16 %v429, %v427
    %v502 = vpack.c.b16 %v430, %v428
    %v503 = vpack.c.b16 %v433, %v431
    %v504 = vpack.c.b16 %v434, %v432
    %v505 = vpack.c.b16 %v437, %v435
    %v506 = vpack.c.b16 %v438, %v436
    %v507 = vpack.c.b16 %v441, %v439
    %v508 = vpack.c.b16 %v442, %v440
    %v509 = vpack.c.b16 %v445, %v443
    %v510 = vpack.c.b16 %v446, %v444
    %v607 = vunpack.c.l.b16 %v223
    %v608 = vunpack.c.l.b16 %v224
    %v609 = vunpack.c.l.b16 %v225
    %v610 = vunpack.c.l.b16 %v226
    %v611 = vunpack.c.l.b16 %v227
    %v612 = vunpack.c.l.b16 %v228
    %v613 = vunpack.c.l.b16 %v229
    %v614 = vunpack.c.l.b16 %v230
    %v615 = vunpack.c.l.b16 %v231
    %v616 = vunpack.c.l.b16 %v232
    %v617 = vunpack.c.l.b16 %v233
    %v618 = vunpack.c.l.b16 %v234
    %v619 = vunpack.c.l.b16 %v235
    %v620 = vunpack.c.l.b16 %v236
    %v621 = vunpack.c.l.b16 %v237
    %v622 = vunpack.c.l.b16 %v238
    %v623 = vunpack.c.l.b16 %v239
    %v624 = vunpack.c.l.b16 %v240
    %v625 = vunpack.c.l.b16 %v241
    %v626 = vunpack.c.l.b16 %v242
    %v627 = vunpack.c.l.b16 %v243
    %v628 = vunpack.c.l.b16 %v244
    %v629 = vunpack.c.l.b16 %v245
    %v630 = vunpack.c.l.b16 %v246
    %v631 = vunpack.c.l.b16 %v247
    %v632 = vunpack.c.l.b16 %v248
    %v633 = vunpack.c.l.b16 %v249
    %v634 = vunpack.c.l.b16 %v250
    %v635 = vunpack.c.l.b16 %v251
    %v636 = vunpack.c.l.b16 %v252
    %v637 = vunpack.c.l.b16 %v253
    %v638 = vunpack.c.l.b16 %v254
    %v639 = vpack.c.b16 %v608, %v607
    %v640 = vpack.c.b16 %v610, %v609
    %v641 = vpack.c.b16 %v612, %v611
    %v642 = vpack.c.b16 %v614, %v613
    %v643 = vpack.c.b16 %v616, %v615
    %v644 = vpack.c.b16 %v618, %v617
    %v645 = vpack.c.b16 %v620, %v619
    %v646 = vpack.c.b16 %v622, %v621
    %v647 = vpack.c.b16 %v624, %v623
    %v648 = vpack.c.b16 %v626, %v625
    %v649 = vpack.c.b16 %v628, %v627
    %v650 = vpack.c.b16 %v630, %v629
    %v651 = vpack.c.b16 %v632, %v631
    %v652 = vpack.c.b16 %v634, %v633
    %v653 = vpack.c.b16 %v636, %v635
    %v654 = vpack.c.b16 %v638, %v637
    %671 = vmatprep.subr.bf16.mxu0 0
    %672 = vmatpush1.bf16.msra.mxu0 %v646
    %673 = vmatprep.subr.bf16.mxu0 0
    %674 = vmatpush1.bf16.msra.mxu0 %v645
    %675 = vmatprep.subr.bf16.mxu0 0
    %676 = vmatpush1.bf16.msra.mxu0 %v644
    %677 = vmatprep.subr.bf16.mxu0 0
    %678 = vmatpush1.bf16.msra.mxu0 %v643
    %679 = vmatprep.subr.bf16.mxu0 0
    %680 = vmatpush1.bf16.msra.mxu0 %v642
    %681 = vmatprep.subr.bf16.mxu0 0
    %682 = vmatpush1.bf16.msra.mxu0 %v641
    %683 = vmatprep.subr.bf16.mxu0 0
    %684 = vmatpush1.bf16.msra.mxu0 %v640
    %685 = vmatprep.subr.bf16.mxu0 0
    %686 = vmatpush1.bf16.msra.mxu0 %v639
    %687 = vmatprep.subr.bf16.mxu0 0
    %688 = vmatpush2.bf16.msra.mxu0 %v654
    %689 = vmatprep.subr.bf16.mxu0 0
    %690 = vmatpush2.bf16.msra.mxu0 %v653
    %691 = vmatprep.subr.bf16.mxu0 0
    %692 = vmatpush2.bf16.msra.mxu0 %v652
    %693 = vmatprep.subr.bf16.mxu0 0
    %694 = vmatpush2.bf16.msra.mxu0 %v651
    %695 = vmatprep.subr.bf16.mxu0 0
    %696 = vmatpush2.bf16.msra.mxu0 %v650
    %697 = vmatprep.subr.bf16.mxu0 0
    %698 = vmatpush2.bf16.msra.mxu0 %v649
    %699 = vmatprep.subr.bf16.mxu0 0
    %700 = vmatpush2.bf16.msra.mxu0 %v648
    %701 = vmatprep.subr.bf16.mxu0 0
    %702 = vmatpush2.bf16.msra.mxu0 %v647
    %703 = vmatprep.mubr.bf16.mxu0 %v448
    %704 = vmatmul.mubr.bf16.gmra.mxu0 %v447
    %v705 = vpop.f32.mrf.mxu0
    %v706 = vadd.f32 0.0, %v705
    %v707 = vpop.f32.mrf.mxu0
    %v708 = vpop.f32.mrf.mxu0
    %v709 = vadd.f32 0.0, %v708
    %v710 = vpop.f32.mrf.mxu0
    %711 = vmatprep.mubr.bf16.mxu0 %v450
    %712 = vmatmul.mubr.bf16.gmra.mxu0 %v449
    %v713 = vpop.f32.mrf.mxu0
    %v714 = vadd.f32 0.0, %v713
    %v715 = vpop.f32.mrf.mxu0
    %v716 = vpop.f32.mrf.mxu0
    %v717 = vadd.f32 0.0, %v716
    %v718 = vpop.f32.mrf.mxu0
    %719 = vmatprep.mubr.bf16.mxu0 %v452
    %720 = vmatmul.mubr.bf16.gmra.mxu0 %v451
    %v721 = vpop.f32.mrf.mxu0
    %v722 = vadd.f32 0.0, %v721
    %v723 = vpop.f32.mrf.mxu0
    %v724 = vpop.f32.mrf.mxu0
    %v725 = vadd.f32 0.0, %v724
    %v726 = vpop.f32.mrf.mxu0
    %727 = vmatprep.mubr.bf16.mxu0 %v454
    %728 = vmatmul.mubr.bf16.gmra.mxu0 %v453
    %v729 = vpop.f32.mrf.mxu0
    %v730 = vadd.f32 0.0, %v729
    %v731 = vpop.f32.mrf.mxu0
    %v732 = vpop.f32.mrf.mxu0
    %v733 = vadd.f32 0.0, %v732
    %v734 = vpop.f32.mrf.mxu0
    %735 = vmatprep.mubr.bf16.mxu0 %v456
    %736 = vmatmul.mubr.bf16.gmra.mxu0 %v455
    %v737 = vpop.f32.mrf.mxu0
    %v738 = vadd.f32 0.0, %v737
    %v739 = vpop.f32.mrf.mxu0
    %v740 = vpop.f32.mrf.mxu0
    %v741 = vadd.f32 0.0, %v740
    %v742 = vpop.f32.mrf.mxu0
    %743 = vmatprep.mubr.bf16.mxu0 %v458
    %744 = vmatmul.mubr.bf16.gmra.mxu0 %v457
    %v745 = vpop.f32.mrf.mxu0
    %v746 = vadd.f32 0.0, %v745
    %v747 = vpop.f32.mrf.mxu0
    %v748 = vpop.f32.mrf.mxu0
    %v749 = vadd.f32 0.0, %v748
    %v750 = vpop.f32.mrf.mxu0
    %751 = vmatprep.mubr.bf16.mxu0 %v460
    %752 = vmatmul.mubr.bf16.gmra.mxu0 %v459
    %v753 = vpop.f32.mrf.mxu0
    %v754 = vadd.f32 0.0, %v753
    %v755 = vpop.f32.mrf.mxu0
    %v756 = vpop.f32.mrf.mxu0
    %v757 = vadd.f32 0.0, %v756
    %v758 = vpop.f32.mrf.mxu0
    %759 = vmatprep.mubr.bf16.mxu0 %v462
    %760 = vmatmul.mubr.bf16.gmra.mxu0 %v461
    %v761 = vpop.f32.mrf.mxu0
    %v762 = vadd.f32 0.0, %v761
    %v763 = vpop.f32.mrf.mxu0
    %v764 = vpop.f32.mrf.mxu0
    %v765 = vadd.f32 0.0, %v764
    %v766 = vpop.f32.mrf.mxu0
    %767 = vmatprep.mubr.bf16.mxu0 %v464
    %768 = vmatmul.mubr.bf16.gmra.mxu0 %v463
    %v769 = vpop.f32.mrf.mxu0
    %v770 = vadd.f32 0.0, %v769
    %v771 = vpop.f32.mrf.mxu0
    %v772 = vpop.f32.mrf.mxu0
    %v773 = vadd.f32 0.0, %v772
    %v774 = vpop.f32.mrf.mxu0
    %775 = vmatprep.mubr.bf16.mxu0 %v466
    %776 = vmatmul.mubr.bf16.gmra.mxu0 %v465
    %v777 = vpop.f32.mrf.mxu0
    %v778 = vadd.f32 0.0, %v777
    %v779 = vpop.f32.mrf.mxu0
    %v780 = vpop.f32.mrf.mxu0
    %v781 = vadd.f32 0.0, %v780
    %v782 = vpop.f32.mrf.mxu0
    %783 = vmatprep.mubr.bf16.mxu0 %v468
    %784 = vmatmul.mubr.bf16.gmra.mxu0 %v467
    %v785 = vpop.f32.mrf.mxu0
    %v786 = vadd.f32 0.0, %v785
    %v787 = vpop.f32.mrf.mxu0
    %v788 = vpop.f32.mrf.mxu0
    %v789 = vadd.f32 0.0, %v788
    %v790 = vpop.f32.mrf.mxu0
    %791 = vmatprep.mubr.bf16.mxu0 %v470
    %792 = vmatmul.mubr.bf16.gmra.mxu0 %v469
    %v793 = vpop.f32.mrf.mxu0
    %v794 = vadd.f32 0.0, %v793
    %v795 = vpop.f32.mrf.mxu0
    %v796 = vpop.f32.mrf.mxu0
    %v797 = vadd.f32 0.0, %v796
    %v798 = vpop.f32.mrf.mxu0
    %799 = vmatprep.mubr.bf16.mxu0 %v472
    %800 = vmatmul.mubr.bf16.gmra.mxu0 %v471
    %v801 = vpop.f32.mrf.mxu0
    %v802 = vadd.f32 0.0, %v801
    %v803 = vpop.f32.mrf.mxu0
    %v804 = vpop.f32.mrf.mxu0
    %v805 = vadd.f32 0.0, %v804
    %v806 = vpop.f32.mrf.mxu0
    %807 = vmatprep.mubr.bf16.mxu0 %v474
    %808 = vmatmul.mubr.bf16.gmra.mxu0 %v473
    %v809 = vpop.f32.mrf.mxu0
    %v810 = vadd.f32 0.0, %v809
    %v811 = vpop.f32.mrf.mxu0
    %v812 = vpop.f32.mrf.mxu0
    %v813 = vadd.f32 0.0, %v812
    %v814 = vpop.f32.mrf.mxu0
    %815 = vmatprep.mubr.bf16.mxu0 %v476
    %816 = vmatmul.mubr.bf16.gmra.mxu0 %v475
    %v817 = vpop.f32.mrf.mxu0
    %v818 = vadd.f32 0.0, %v817
    %v819 = vpop.f32.mrf.mxu0
    %v820 = vpop.f32.mrf.mxu0
    %v821 = vadd.f32 0.0, %v820
    %v822 = vpop.f32.mrf.mxu0
    %823 = vmatprep.mubr.bf16.mxu0 %v478
    %824 = vmatmul.mubr.bf16.gmra.mxu0 %v477
    %v825 = vpop.f32.mrf.mxu0
    %v826 = vadd.f32 0.0, %v825
    %v827 = vpop.f32.mrf.mxu0
    %v828 = vpop.f32.mrf.mxu0
    %v829 = vadd.f32 0.0, %v828
    %v830 = vpop.f32.mrf.mxu0
    %831 = vmatprep.mubr.bf16.mxu0 %v480
    %832 = vmatmul.mubr.bf16.gmra.mxu0 %v479
    %v833 = vpop.f32.mrf.mxu0
    %v834 = vadd.f32 0.0, %v833
    %v835 = vpop.f32.mrf.mxu0
    %v836 = vpop.f32.mrf.mxu0
    %v837 = vadd.f32 0.0, %v836
    %v838 = vpop.f32.mrf.mxu0
    %839 = vmatprep.mubr.bf16.mxu0 %v482
    %840 = vmatmul.mubr.bf16.gmra.mxu0 %v481
    %v841 = vpop.f32.mrf.mxu0
    %v842 = vadd.f32 0.0, %v841
    %v843 = vpop.f32.mrf.mxu0
    %v844 = vpop.f32.mrf.mxu0
    %v845 = vadd.f32 0.0, %v844
    %v846 = vpop.f32.mrf.mxu0
    %847 = vmatprep.mubr.bf16.mxu0 %v484
    %848 = vmatmul.mubr.bf16.gmra.mxu0 %v483
    %v849 = vpop.f32.mrf.mxu0
    %v850 = vadd.f32 0.0, %v849
    %v851 = vpop.f32.mrf.mxu0
    %v852 = vpop.f32.mrf.mxu0
    %v853 = vadd.f32 0.0, %v852
    %v854 = vpop.f32.mrf.mxu0
    %855 = vmatprep.mubr.bf16.mxu0 %v486
    %856 = vmatmul.mubr.bf16.gmra.mxu0 %v485
    %v857 = vpop.f32.mrf.mxu0
    %v858 = vadd.f32 0.0, %v857
    %v859 = vpop.f32.mrf.mxu0
    %v860 = vpop.f32.mrf.mxu0
    %v861 = vadd.f32 0.0, %v860
    %v862 = vpop.f32.mrf.mxu0
    %863 = vmatprep.mubr.bf16.mxu0 %v488
    %864 = vmatmul.mubr.bf16.gmra.mxu0 %v487
    %v865 = vpop.f32.mrf.mxu0
    %v866 = vadd.f32 0.0, %v865
    %v867 = vpop.f32.mrf.mxu0
    %v868 = vpop.f32.mrf.mxu0
    %v869 = vadd.f32 0.0, %v868
    %v870 = vpop.f32.mrf.mxu0
    %871 = vmatprep.mubr.bf16.mxu0 %v490
    %872 = vmatmul.mubr.bf16.gmra.mxu0 %v489
    %v873 = vpop.f32.mrf.mxu0
    %v874 = vadd.f32 0.0, %v873
    %v875 = vpop.f32.mrf.mxu0
    %v876 = vpop.f32.mrf.mxu0
    %v877 = vadd.f32 0.0, %v876
    %v878 = vpop.f32.mrf.mxu0
    %879 = vmatprep.mubr.bf16.mxu0 %v492
    %880 = vmatmul.mubr.bf16.gmra.mxu0 %v491
    %v881 = vpop.f32.mrf.mxu0
    %v882 = vadd.f32 0.0, %v881
    %v883 = vpop.f32.mrf.mxu0
    %v884 = vpop.f32.mrf.mxu0
    %v885 = vadd.f32 0.0, %v884
    %v886 = vpop.f32.mrf.mxu0
    %887 = vmatprep.mubr.bf16.mxu0 %v494
    %888 = vmatmul.mubr.bf16.gmra.mxu0 %v493
    %v889 = vpop.f32.mrf.mxu0
    %v890 = vadd.f32 0.0, %v889
    %v891 = vpop.f32.mrf.mxu0
    %v892 = vpop.f32.mrf.mxu0
    %v893 = vadd.f32 0.0, %v892
    %v894 = vpop.f32.mrf.mxu0
    %895 = vmatprep.mubr.bf16.mxu0 %v496
    %896 = vmatmul.mubr.bf16.gmra.mxu0 %v495
    %v897 = vpop.f32.mrf.mxu0
    %v898 = vadd.f32 0.0, %v897
    %v899 = vpop.f32.mrf.mxu0
    %v900 = vpop.f32.mrf.mxu0
    %v901 = vadd.f32 0.0, %v900
    %v902 = vpop.f32.mrf.mxu0
    %903 = vmatprep.mubr.bf16.mxu0 %v498
    %904 = vmatmul.mubr.bf16.gmra.mxu0 %v497
    %v905 = vpop.f32.mrf.mxu0
    %v906 = vadd.f32 0.0, %v905
    %v907 = vpop.f32.mrf.mxu0
    %v908 = vpop.f32.mrf.mxu0
    %v909 = vadd.f32 0.0, %v908
    %v910 = vpop.f32.mrf.mxu0
    %911 = vmatprep.mubr.bf16.mxu0 %v500
    %912 = vmatmul.mubr.bf16.gmra.mxu0 %v499
    %v913 = vpop.f32.mrf.mxu0
    %v914 = vadd.f32 0.0, %v913
    %v915 = vpop.f32.mrf.mxu0
    %v916 = vpop.f32.mrf.mxu0
    %v917 = vadd.f32 0.0, %v916
    %v918 = vpop.f32.mrf.mxu0
    %919 = vmatprep.mubr.bf16.mxu0 %v502
    %920 = vmatmul.mubr.bf16.gmra.mxu0 %v501
    %v921 = vpop.f32.mrf.mxu0
    %v922 = vadd.f32 0.0, %v921
    %v923 = vpop.f32.mrf.mxu0
    %v924 = vpop.f32.mrf.mxu0
    %v925 = vadd.f32 0.0, %v924
    %v926 = vpop.f32.mrf.mxu0
    %927 = vmatprep.mubr.bf16.mxu0 %v504
    %928 = vmatmul.mubr.bf16.gmra.mxu0 %v503
    %v929 = vpop.f32.mrf.mxu0
    %v930 = vadd.f32 0.0, %v929
    %v931 = vpop.f32.mrf.mxu0
    %v932 = vpop.f32.mrf.mxu0
    %v933 = vadd.f32 0.0, %v932
    %v934 = vpop.f32.mrf.mxu0
    %935 = vmatprep.mubr.bf16.mxu0 %v506
    %936 = vmatmul.mubr.bf16.gmra.mxu0 %v505
    %v937 = vpop.f32.mrf.mxu0
    %v938 = vadd.f32 0.0, %v937
    %v939 = vpop.f32.mrf.mxu0
    %v940 = vpop.f32.mrf.mxu0
    %v941 = vadd.f32 0.0, %v940
    %v942 = vpop.f32.mrf.mxu0
    %943 = vmatprep.mubr.bf16.mxu0 %v508
    %944 = vmatmul.mubr.bf16.gmra.mxu0 %v507
    %v945 = vpop.f32.mrf.mxu0
    %v946 = vadd.f32 0.0, %v945
    %v947 = vpop.f32.mrf.mxu0
    %v948 = vpop.f32.mrf.mxu0
    %v949 = vadd.f32 0.0, %v948
    %v950 = vpop.f32.mrf.mxu0
    %951 = vmatprep.mubr.bf16.mxu0 %v510
    %952 = vmatmul.mubr.bf16.gmra.mxu0 %v509
    %v953 = vpop.f32.mrf.mxu0
    %v954 = vadd.f32 0.0, %v953
    %v955 = vpop.f32.mrf.mxu0
    %v956 = vpop.f32.mrf.mxu0
    %v957 = vadd.f32 0.0, %v956
    %v958 = vpop.f32.mrf.mxu0
    %959 = vdwg.mxu0
    %v960 = vadd.f32 %v95, %v706
    %v961 = vadd.f32 %v96, %v709
    %v962 = vadd.f32 %v97, %v714
    %v963 = vadd.f32 %v98, %v717
    %v964 = vadd.f32 %v99, %v722
    %v965 = vadd.f32 %v100, %v725
    %v966 = vadd.f32 %v101, %v730
    %v967 = vadd.f32 %v102, %v733
    %v968 = vadd.f32 %v103, %v738
    %v969 = vadd.f32 %v104, %v741
    %v970 = vadd.f32 %v105, %v746
    %v971 = vadd.f32 %v106, %v749
    %v972 = vadd.f32 %v107, %v754
    %v973 = vadd.f32 %v108, %v757
    %v974 = vadd.f32 %v109, %v762
    %v975 = vadd.f32 %v110, %v765
    %v976 = vadd.f32 %v111, %v770
    %v977 = vadd.f32 %v112, %v773
    %v978 = vadd.f32 %v113, %v778
    %v979 = vadd.f32 %v114, %v781
    %v980 = vadd.f32 %v115, %v786
    %v981 = vadd.f32 %v116, %v789
    %v982 = vadd.f32 %v117, %v794
    %v983 = vadd.f32 %v118, %v797
    %v984 = vadd.f32 %v119, %v802
    %v985 = vadd.f32 %v120, %v805
    %v986 = vadd.f32 %v121, %v810
    %v987 = vadd.f32 %v122, %v813
    %v988 = vadd.f32 %v123, %v818
    %v989 = vadd.f32 %v124, %v821
    %v990 = vadd.f32 %v125, %v826
    %v991 = vadd.f32 %v126, %v829
    %v992 = vadd.f32 %v127, %v834
    %v993 = vadd.f32 %v128, %v837
    %v994 = vadd.f32 %v129, %v842
    %v995 = vadd.f32 %v130, %v845
    %v996 = vadd.f32 %v131, %v850
    %v997 = vadd.f32 %v132, %v853
    %v998 = vadd.f32 %v133, %v858
    %v999 = vadd.f32 %v134, %v861
    %v1000 = vadd.f32 %v135, %v866
    %v1001 = vadd.f32 %v136, %v869
    %v1002 = vadd.f32 %v137, %v874
    %v1003 = vadd.f32 %v138, %v877
    %v1004 = vadd.f32 %v139, %v882
    %v1005 = vadd.f32 %v140, %v885
    %v1006 = vadd.f32 %v141, %v890
    %v1007 = vadd.f32 %v142, %v893
    %v1008 = vadd.f32 %v143, %v898
    %v1009 = vadd.f32 %v144, %v901
    %v1010 = vadd.f32 %v145, %v906
    %v1011 = vadd.f32 %v146, %v909
    %v1012 = vadd.f32 %v147, %v914
    %v1013 = vadd.f32 %v148, %v917
    %v1014 = vadd.f32 %v149, %v922
    %v1015 = vadd.f32 %v150, %v925
    %v1016 = vadd.f32 %v151, %v930
    %v1017 = vadd.f32 %v152, %v933
    %v1018 = vadd.f32 %v153, %v938
    %v1019 = vadd.f32 %v154, %v941
    %v1020 = vadd.f32 %v155, %v946
    %v1021 = vadd.f32 %v156, %v949
    %v1022 = vadd.f32 %v157, %v954
    %v1023 = vadd.f32 %v158, %v957
    %vm1024 = vcmask 523264
    %1025 = vst.msk [vmem:[%s2] sm:$0xff] %vm1024, %v960
    %1026 = vst.msk [vmem:[%s2 + $0x8] sm:$0xff] %vm1024, %v961
    %1027 = vst.msk [vmem:[%s2 + $0x10] sm:$0xff] %vm1024, %v962
    %1028 = vst.msk [vmem:[%s2 + $0x18] sm:$0xff] %vm1024, %v963
    %1029 = vst.msk [vmem:[%s2 + $0x20] sm:$0xff] %vm1024, %v964
    %1030 = vst.msk [vmem:[%s2 + $0x28] sm:$0xff] %vm1024, %v965
    %1031 = vst.msk [vmem:[%s2 + $0x30] sm:$0xff] %vm1024, %v966
    %1032 = vst.msk [vmem:[%s2 + $0x38] sm:$0xff] %vm1024, %v967
    %1033 = vst.msk [vmem:[%s2 + $0x40] sm:$0xff] %vm1024, %v968
    %1034 = vst.msk [vmem:[%s2 + $0x48] sm:$0xff] %vm1024, %v969
    %1035 = vst.msk [vmem:[%s2 + $0x50] sm:$0xff] %vm1024, %v970
    %1036 = vst.msk [vmem:[%s2 + $0x58] sm:$0xff] %vm1024, %v971
    %1037 = vst.msk [vmem:[%s2 + $0x60] sm:$0xff] %vm1024, %v972
    %1038 = vst.msk [vmem:[%s2 + $0x68] sm:$0xff] %vm1024, %v973
    %1039 = vst.msk [vmem:[%s2 + $0x70] sm:$0xff] %vm1024, %v974
    %1040 = vst.msk [vmem:[%s2 + $0x78] sm:$0xff] %vm1024, %v975
    %1041 = vst.msk [vmem:[%s2 + $0x80] sm:$0xff] %vm1024, %v976
    %1042 = vst.msk [vmem:[%s2 + $0x88] sm:$0xff] %vm1024, %v977
    %1043 = vst.msk [vmem:[%s2 + $0x90] sm:$0xff] %vm1024, %v978
    %1044 = vst.msk [vmem:[%s2 + $0x98] sm:$0xff] %vm1024, %v979
    %1045 = vst.msk [vmem:[%s2 + $0xa0] sm:$0xff] %vm1024, %v980
    %1046 = vst.msk [vmem:[%s2 + $0xa8] sm:$0xff] %vm1024, %v981
    %1047 = vst.msk [vmem:[%s2 + $0xb0] sm:$0xff] %vm1024, %v982
    %1048 = vst.msk [vmem:[%s2 + $0xb8] sm:$0xff] %vm1024, %v983
    %1049 = vst.msk [vmem:[%s2 + $0xc0] sm:$0xff] %vm1024, %v984
    %1050 = vst.msk [vmem:[%s2 + $0xc8] sm:$0xff] %vm1024, %v985
    %1051 = vst.msk [vmem:[%s2 + $0xd0] sm:$0xff] %vm1024, %v986
    %1052 = vst.msk [vmem:[%s2 + $0xd8] sm:$0xff] %vm1024, %v987
    %1053 = vst.msk [vmem:[%s2 + $0xe0] sm:$0xff] %vm1024, %v988
    %1054 = vst.msk [vmem:[%s2 + $0xe8] sm:$0xff] %vm1024, %v989
    %1055 = vst.msk [vmem:[%s2 + $0xf0] sm:$0xff] %vm1024, %v990
    %1056 = vst.msk [vmem:[%s2 + $0xf8] sm:$0xff] %vm1024, %v991
    %1057 = vst.msk [vmem:[%s2 + $0x100] sm:$0xff] %vm1024, %v992
    %1058 = vst.msk [vmem:[%s2 + $0x108] sm:$0xff] %vm1024, %v993
    %1059 = vst.msk [vmem:[%s2 + $0x110] sm:$0xff] %vm1024, %v994
    %1060 = vst.msk [vmem:[%s2 + $0x118] sm:$0xff] %vm1024, %v995
    %1061 = vst.msk [vmem:[%s2 + $0x120] sm:$0xff] %vm1024, %v996
    %1062 = vst.msk [vmem:[%s2 + $0x128] sm:$0xff] %vm1024, %v997
    %1063 = vst.msk [vmem:[%s2 + $0x130] sm:$0xff] %vm1024, %v998
    %1064 = vst.msk [vmem:[%s2 + $0x138] sm:$0xff] %vm1024, %v999
    %1065 = vst.msk [vmem:[%s2 + $0x140] sm:$0xff] %vm1024, %v1000
    %1066 = vst.msk [vmem:[%s2 + $0x148] sm:$0xff] %vm1024, %v1001
    %1067 = vst.msk [vmem:[%s2 + $0x150] sm:$0xff] %vm1024, %v1002
    %1068 = vst.msk [vmem:[%s2 + $0x158] sm:$0xff] %vm1024, %v1003
    %1069 = vst.msk [vmem:[%s2 + $0x160] sm:$0xff] %vm1024, %v1004
    %1070 = vst.msk [vmem:[%s2 + $0x168] sm:$0xff] %vm1024, %v1005
    %1071 = vst.msk [vmem:[%s2 + $0x170] sm:$0xff] %vm1024, %v1006
    %1072 = vst.msk [vmem:[%s2 + $0x178] sm:$0xff] %vm1024, %v1007
    %1073 = vst.msk [vmem:[%s2 + $0x180] sm:$0xff] %vm1024, %v1008
    %1074 = vst.msk [vmem:[%s2 + $0x188] sm:$0xff] %vm1024, %v1009
    %1075 = vst.msk [vmem:[%s2 + $0x190] sm:$0xff] %vm1024, %v1010
    %1076 = vst.msk [vmem:[%s2 + $0x198] sm:$0xff] %vm1024, %v1011
    %1077 = vst.msk [vmem:[%s2 + $0x1a0] sm:$0xff] %vm1024, %v1012
    %1078 = vst.msk [vmem:[%s2 + $0x1a8] sm:$0xff] %vm1024, %v1013
    %1079 = vst.msk [vmem:[%s2 + $0x1b0] sm:$0xff] %vm1024, %v1014
    %1080 = vst.msk [vmem:[%s2 + $0x1b8] sm:$0xff] %vm1024, %v1015
    %1081 = vst.msk [vmem:[%s2 + $0x1c0] sm:$0xff] %vm1024, %v1016
    %1082 = vst.msk [vmem:[%s2 + $0x1c8] sm:$0xff] %vm1024, %v1017
    %1083 = vst.msk [vmem:[%s2 + $0x1d0] sm:$0xff] %vm1024, %v1018
    %1084 = vst.msk [vmem:[%s2 + $0x1d8] sm:$0xff] %vm1024, %v1019
    %1085 = vst.msk [vmem:[%s2 + $0x1e0] sm:$0xff] %vm1024, %v1020
    %1086 = vst.msk [vmem:[%s2 + $0x1e8] sm:$0xff] %vm1024, %v1021
    %1087 = vst.msk [vmem:[%s2 + $0x1f0] sm:$0xff] %vm1024, %v1022
    %1088 = vst.msk [vmem:[%s2 + $0x1f8] sm:$0xff] %vm1024, %v1023
    // Predicated region
    $region18: #{tpu_custom_call.1} parent=1 // pred_check
      _
    $region19: #{tpu_custom_call.1} parent=1 // pred_check_branch
      %1090 = sbr.rel (0) target = $region21
    $region20: #{tpu_custom_call.1} parent=1 // pred_region
      _
    $region21: #{tpu_custom_call.1} parent=1 // pred_fallthru
      _
    // Predicated region
    $region22: #{tpu_custom_call.1} parent=1 // pred_check
      _
    $region23: #{tpu_custom_call.1} parent=1 // pred_check_branch
      %1092 = sbr.rel (0) target = $region25
    $region24: #{tpu_custom_call.1} parent=1 // pred_region
      _
    $region25: #{tpu_custom_call.1} parent=1 // pred_fallthru
      _
    %1093 = vsyncpa [#allocation3], 1

</llo_original>
